<compile_context>
chip_gen: v5e
topology: v5e:2x2
jax: 0.10.0
libtpu: 0.0.40
codegen_flags: <defaults>
</compile_context>

<pallas_src>
import math

import jax
import jax.numpy as jnp
from jax.experimental import pallas as pl
from jax.experimental.pallas import tpu as pltpu

EPS = 1e-6
LANE = 128
SUB = 8


def _make_kernel(total, tr, tiles_per_core, exact_cover, first_ragged_tile):
    def kernel(x_ref, y_ref, out_ref):
        c = pl.program_id(0)          # parallel (per-TensorCore) axis
        i = pl.program_id(1)          # reduction axis
        t = c * tiles_per_core + i    # logical tile index into the row slab

        @pl.when(i == 0)
        def _():
            out_ref[...] = jnp.zeros_like(out_ref)

        d = x_ref[...].astype(jnp.float32) - y_ref[...].astype(jnp.float32)
        err = jnp.sqrt(d * d + jnp.float32(EPS))

        def fold(e):
            # (tr, 128) -> (1, 8, 128) via vreg-to-vreg VPU adds only
            # (no cross-lane XLU reduce in the hot loop).
            return e.reshape(tr // SUB, SUB, LANE).sum(axis=0)[None]

        if exact_cover:
            # Every tile on every core is fully in range: no masking anywhere.
            out_ref[...] += fold(err)
        else:
            @pl.when(t < first_ragged_tile)
            def _():
                out_ref[...] += fold(err)

            @pl.when(t >= first_ragged_tile)
            def _():
                # Tail tile (or a duplicated clamp tile): mask by flat index.
                row = jax.lax.broadcasted_iota(jnp.int32, (tr, LANE), 0) + t * tr
                col = jax.lax.broadcasted_iota(jnp.int32, (tr, LANE), 1)
                valid = row * LANE + col < total
                out_ref[...] += fold(jnp.where(valid, err, 0.0))

    return kernel


def l1_charbonnier_loss(X, Y, *, tile_rows=2048, num_cores=2):
    """Mean Charbonnier error; matches PyTorch L1_Charbonnier_loss.forward."""
    assert X.shape == Y.shape
    total = math.prod(X.shape)

    # Lane-dense slab (rows, 128).  Common case: pure reshape, no extra HBM copy.
    rows = max(SUB, pl.cdiv(total, LANE))
    padded = rows * LANE
    xf = X.reshape(-1)
    yf = Y.reshape(-1)
    if padded != total:
        # Rare path (element count not a multiple of 128, or tiny input):
        # minimal pad so the 2-D reshape is legal.  Padded values are ignored
        # by the in-kernel mask, so no post-hoc correction term is needed.
        xf = jnp.pad(xf, (0, padded - total))
        yf = jnp.pad(yf, (0, padded - total))
    xf = xf.reshape(rows, LANE)
    yf = yf.reshape(rows, LANE)

    # Tile rows: multiple of 8 (sublane), capped by the slab.  Default 2048
    # -> 2 inputs x 2 pipeline buffers x 1 MiB = 4 MiB, well under the default
    # scoped VMEM on v5e (16 MiB), v6e (32 MiB) and v7x (32 MiB).
    # Note: keep tile_rows >= 16 if inputs are 16-bit dtypes (sublane packing).
    tr = max(SUB, (min(tile_rows, rows) // SUB) * SUB)
    chunk = tr * LANE

    n_tiles = pl.cdiv(rows, tr)
    tiles_per_core = pl.cdiv(n_tiles, num_cores)
    exact_cover = (num_cores * tiles_per_core * chunk == total)
    first_ragged_tile = total // chunk  # first logical tile with any OOR element

    kernel = _make_kernel(total, tr, tiles_per_core, exact_cover, first_ragged_tile)

    def in_map(c, i):
        # Clamp so a core's trailing (fully out-of-range) tile re-reads the last
        # valid tile instead of DMA-ing past the array; its contribution is
        # masked to zero inside the kernel.
        return (jnp.minimum(c * tiles_per_core + i, n_tiles - 1), 0)

    partials = pl.pallas_call(
        kernel,
        out_shape=jax.ShapeDtypeStruct((num_cores, SUB, LANE), jnp.float32),
        grid_spec=pltpu.PrefetchScalarGridSpec(
            num_scalar_prefetch=0,
            grid=(num_cores, tiles_per_core),
            in_specs=[
                pl.BlockSpec((tr, LANE), in_map),
                pl.BlockSpec((tr, LANE), in_map),
            ],
            out_specs=pl.BlockSpec((1, SUB, LANE), lambda c, i: (c, 0, 0)),
        ),
        compiler_params=pltpu.CompilerParams(
            dimension_semantics=("parallel", "arbitrary"),
        ),
    )(xf, yf)

    # Single cheap cross-lane reduction of the per-core partials, then mean.
    return jnp.sum(partials) / jnp.float32(total)


def _reference(X, Y):
    d = X.astype(jnp.float32) - Y.astype(jnp.float32)
    return jnp.sum(jnp.sqrt(d * d + jnp.float32(EPS))) / X.size


if __name__ == "__main__":
    key = jax.random.PRNGKey(0)
    kx, ky = jax.random.split(key)
    N, C, H, W = 2, 4, 16, 16
    X = jax.random.normal(kx, (N, C, H, W), dtype=jnp.float32)
    Y = jax.random.normal(ky, (N, C, H, W), dtype=jnp.float32)

    loss = jax.block_until_ready(l1_charbonnier_loss(X, Y))
    ref = jax.block_until_ready(_reference(X, Y))
    assert jnp.allclose(loss, ref, rtol=1e-5, atol=1e-6), (loss, ref)
    print("KERNEL_OK")
</pallas_src>

<mosaic_0001>
module attributes {stable_mosaic.version = 11 : i64} {
  func.func @kernel(%arg0: i32, %arg1: i32, %arg2: memref<16x128xf32, #tpu.memory_space<vmem>>, %arg3: memref<16x128xf32, #tpu.memory_space<vmem>>, %arg4: memref<1x8x128xf32, #tpu.memory_space<vmem>>) attributes {dimension_semantics = [#tpu.dimension_semantics<parallel>, #tpu.dimension_semantics<arbitrary>], iteration_bounds = array<i64: 2, 1>, scalar_prefetch = 0 : i64, scratch_operands = 0 : i64, tpu.core_type = #tpu.core_type<tc>, window_params = [{transform_indices = @transform_0, window_bounds = array<i64: 16, 128>}, {transform_indices = @transform_1, window_bounds = array<i64: 16, 128>}, {transform_indices = @transform_2, window_bounds = array<i64: 1, 8, 128>}]} {
    %c1_i32 = arith.constant 1 : i32
    %0 = arith.muli %arg0, %c1_i32 : i32
    %1 = arith.addi %0, %arg1 : i32
    %c0_i32 = arith.constant 0 : i32
    %2 = arith.cmpi eq, %arg1, %c0_i32 : i32
    %3 = arith.extui %2 : i1 to i32
    %c0_i32_0 = arith.constant 0 : i32
    %4 = arith.cmpi ne, %3, %c0_i32_0 : i32
    scf.if %4 {
      %cst_8 = arith.constant 0.000000e+00 : f32
      %18 = vector.broadcast %cst_8 : f32 to vector<1x8x128xf32>
      %c0_9 = arith.constant 0 : index
      %c0_10 = arith.constant 0 : index
      %c0_11 = arith.constant 0 : index
      %19 = vector.load %arg4[%c0_9, %c0_10, %c0_11] : memref<1x8x128xf32, #tpu.memory_space<vmem>>, vector<1x8x128xf32>
      tpu.vector_store %arg4[%c0_9, %c0_10, %c0_11], %18 {strides = array<i32>} : memref<1x8x128xf32, #tpu.memory_space<vmem>>, vector<1x8x128xf32>,
    } else {
    }
    %c0 = arith.constant 0 : index
    %c0_1 = arith.constant 0 : index
    %5 = vector.load %arg2[%c0, %c0_1] : memref<16x128xf32, #tpu.memory_space<vmem>>, vector<16x128xf32>
    %c0_2 = arith.constant 0 : index
    %c0_3 = arith.constant 0 : index
    %6 = vector.load %arg3[%c0_2, %c0_3] : memref<16x128xf32, #tpu.memory_space<vmem>>, vector<16x128xf32>
    %7 = arith.subf %5, %6 : vector<16x128xf32>
    %8 = arith.mulf %7, %7 : vector<16x128xf32>
    %cst = arith.constant 9.99999997E-7 : f32
    %9 = vector.broadcast %cst : f32 to vector<16x128xf32>
    %10 = arith.addf %8, %9 : vector<16x128xf32>
    %11 = math.sqrt %10 : vector<16x128xf32>
    %c1_i32_4 = arith.constant 1 : i32
    %12 = arith.cmpi slt, %1, %c1_i32_4 : i32
    %13 = arith.extui %12 : i1 to i32
    %c0_i32_5 = arith.constant 0 : i32
    %14 = arith.cmpi ne, %13, %c0_i32_5 : i32
    scf.if %14 {
      %c0_8 = arith.constant 0 : index
      %c0_9 = arith.constant 0 : index
      %c0_10 = arith.constant 0 : index
      %18 = vector.load %arg4[%c0_8, %c0_9, %c0_10] : memref<1x8x128xf32, #tpu.memory_space<vmem>>, vector<1x8x128xf32>
      %19 = vector.shape_cast %11 : vector<16x128xf32> to vector<2x8x128xf32>
      %cst_11 = arith.constant dense<0.000000e+00> : vector<8x128xf32>
      %20 = vector.multi_reduction <add>, %19, %cst_11 [0] : vector<2x8x128xf32> to vector<8x128xf32>
      %21 = vector.shape_cast %20 : vector<8x128xf32> to vector<1x8x128xf32>
      %22 = arith.addf %18, %21 : vector<1x8x128xf32>
      %c0_12 = arith.constant 0 : index
      %c0_13 = arith.constant 0 : index
      %c0_14 = arith.constant 0 : index
      %23 = vector.load %arg4[%c0_12, %c0_13, %c0_14] : memref<1x8x128xf32, #tpu.memory_space<vmem>>, vector<1x8x128xf32>
      tpu.vector_store %arg4[%c0_12, %c0_13, %c0_14], %22 {strides = array<i32>} : memref<1x8x128xf32, #tpu.memory_space<vmem>>, vector<1x8x128xf32>,
    } else {
    }
    %c1_i32_6 = arith.constant 1 : i32
    %15 = arith.cmpi sge, %1, %c1_i32_6 : i32
    %16 = arith.extui %15 : i1 to i32
    %c0_i32_7 = arith.constant 0 : i32
    %17 = arith.cmpi ne, %16, %c0_i32_7 : i32
    scf.if %17 {
      %18 = tpu.iota {dimensions = array<i32: 0>} : vector<16x128xi32>
      %c16_i32 = arith.constant 16 : i32
      %19 = arith.muli %1, %c16_i32 : i32
      %20 = vector.broadcast %19 : i32 to vector<16x128xi32>
      %21 = arith.addi %18, %20 : vector<16x128xi32>
      %22 = tpu.iota {dimensions = array<i32: 1>} : vector<16x128xi32>
      %c128_i32 = arith.constant 128 : i32
      %23 = vector.broadcast %c128_i32 : i32 to vector<16x128xi32>
      %24 = arith.muli %21, %23 : vector<16x128xi32>
      %25 = arith.addi %24, %22 : vector<16x128xi32>
      %c2048_i32 = arith.constant 2048 : i32
      %26 = vector.broadcast %c2048_i32 : i32 to vector<16x128xi32>
      %27 = arith.cmpi slt, %25, %26 : vector<16x128xi32>
      %c0_8 = arith.constant 0 : index
      %c0_9 = arith.constant 0 : index
      %c0_10 = arith.constant 0 : index
      %28 = vector.load %arg4[%c0_8, %c0_9, %c0_10] : memref<1x8x128xf32, #tpu.memory_space<vmem>>, vector<1x8x128xf32>
      %cst_11 = arith.constant 0.000000e+00 : f32
      %29 = vector.broadcast %cst_11 : f32 to vector<16x128xf32>
      %30 = arith.select %27, %11, %29 : vector<16x128xi1>, vector<16x128xf32>
      %31 = vector.shape_cast %30 : vector<16x128xf32> to vector<2x8x128xf32>
      %cst_12 = arith.constant dense<0.000000e+00> : vector<8x128xf32>
      %32 = vector.multi_reduction <add>, %31, %cst_12 [0] : vector<2x8x128xf32> to vector<8x128xf32>
      %33 = vector.shape_cast %32 : vector<8x128xf32> to vector<1x8x128xf32>
      %34 = arith.addf %28, %33 : vector<1x8x128xf32>
      %c0_13 = arith.constant 0 : index
      %c0_14 = arith.constant 0 : index
      %c0_15 = arith.constant 0 : index
      %35 = vector.load %arg4[%c0_13, %c0_14, %c0_15] : memref<1x8x128xf32, #tpu.memory_space<vmem>>, vector<1x8x128xf32>
      tpu.vector_store %arg4[%c0_13, %c0_14, %c0_15], %34 {strides = array<i32>} : memref<1x8x128xf32, #tpu.memory_space<vmem>>, vector<1x8x128xf32>,
    } else {
    }
    return
  }
  func.func @transform_0(%arg0: i32, %arg1: i32) -> (i32, i32) {
    %c1_i32 = arith.constant 1 : i32
    %0 = arith.muli %arg0, %c1_i32 : i32
    %1 = arith.addi %0, %arg1 : i32
    %c0_i32 = arith.constant 0 : i32
    %2 = arith.minsi %1, %c0_i32 : i32
    %c0_i32_0 = arith.constant 0 : i32
    %c0_i32_1 = arith.constant 0 : i32
    return %2, %c0_i32_0 : i32, i32
  }
  func.func @transform_1(%arg0: i32, %arg1: i32) -> (i32, i32) {
    %c1_i32 = arith.constant 1 : i32
    %0 = arith.muli %arg0, %c1_i32 : i32
    %1 = arith.addi %0, %arg1 : i32
    %c0_i32 = arith.constant 0 : i32
    %2 = arith.minsi %1, %c0_i32 : i32
    %c0_i32_0 = arith.constant 0 : i32
    %c0_i32_1 = arith.constant 0 : i32
    return %2, %c0_i32_0 : i32, i32
  }
  func.func @transform_2(%arg0: i32, %arg1: i32) -> (i32, i32, i32) {
    %c0_i32 = arith.constant 0 : i32
    %c0_i32_0 = arith.constant 0 : i32
    %c0_i32_1 = arith.constant 0 : i32
    return %arg0, %c0_i32, %c0_i32_0 : i32, i32, i32
  }
}

</mosaic_0001>

<llo_original>
// kernel: tpu_custom_call.1
$region0: #{tpu_custom_call.1}
  #allocation0 [shape = 'u32[]', space=smem, size = 0x4, offset = 0x4, fixed_abs, tag = 'smem constant byte address 0x4 - core index']
  #allocation1 [shape = 'u32[72,128]{1,0:T(1,128)}', space=vmem, size = 0x9000, scoped, tag = 'internal scratch']
  %s0 = inlined_call_operand.hbm [shape: f32[16,128], index: 0, kind: input, shape index: {}]
  %s1 = inlined_call_operand.hbm [shape: f32[16,128], index: 1, kind: input, shape index: {}]
  %s2 = inlined_call_operand.hbm [shape: f32[2,8,128], index: 2, kind: output, shape index: {}]
  %s3 = sld [smem:[#allocation0]]
  $region61: #{tpu_custom_call.1} parent=0
    _
  %s5 = ssub.s32 1, %s3
  %s6 = scalar_select 0, %s5, %s3
  $region1: #{tpu_custom_call.1} parent=0
    #allocation2 [shape = 'u8[16384]{0}', space=vmem, size = 0x4000, scoped, tag = 'input window, operand 0']
    #allocation3 [shape = 's32[2]{0}', space=sflag, size = 0x8, scoped, tag = 'scoped memory for tpu_custom_call.1']
    #allocation4 [shape = 's32[2]{0}', space=sflag, size = 0x8, scoped, tag = 'scoped memory for tpu_custom_call.1']
    #allocation5 [shape = 'u8[16384]{0}', space=vmem, size = 0x4000, scoped, tag = 'input window, operand 1']
    #allocation6 [shape = 's32[2]{0}', space=sflag, size = 0x8, scoped, tag = 'scoped memory for tpu_custom_call.1']
    #allocation7 [shape = 'u8[8192]{0}', space=vmem, size = 0x2000, scoped, tag = 'output window, operand 0']
    %7 = vsyncpa [#allocation3], 0
    %s8 = scalar_lea.sflag [#allocation3], 1
    %9 = vsyncpa %s8, 0
    %10 = vsyncpa [#allocation6], 0
    %s11 = scalar_lea.sflag [#allocation6], 1
    %12 = vsyncpa %s11, 0
    %13 = vsyncpa [#allocation4], 0
    %s14 = scalar_lea.sflag [#allocation4], 1
    %15 = vsyncpa %s14, 0
    loop: start=0, step=1, limit=4
    $region2: #{tpu_custom_call.1} parent=1 // loop_pre_header
      _
    $region3: #{tpu_custom_call.1} parent=1 // loop_header
      %s17 = sphi 0, %s21
      %p18 = scmp.ge.s32.totalorder %s17, 4
      %s24 = sphi 0, %s36
      %s25 = sphi 0, %s32
      %s26 = sphi 0, %s24
      %s27 = sphi 0, %s25
      %s28 = sphi 0, %s26
      %s29 = sphi 0, %s27
      %s45 = sphi 0, %s47
      %s48 = sphi 0, %s45
      %s49 = sphi 0, %s48
      %s65 = sphi 0, %s49
      %s77 = sphi 0, %s79
      %s80 = sphi 0, %s77
      %s81 = sphi 0, %s80
      %s97 = sphi 0, %s81
      %s103 = sphi 0, %s105
      %s106 = sphi 0, %s103
      %s107 = sphi 0, %s106
      %s123 = sphi 0, %s107
    $region4: #{tpu_custom_call.1} parent=1 // loop_header_branch
      %20 = sbr.rel (%p18) target = $region8
    $region5: #{tpu_custom_call.1} parent=1 // loop_body
      %s22 = ssub.s32 %s17, 1
      %s23 = ssub.s32 %s17, 2
      %s30 = sadd.s32 1, %s25
      %p31 = scmp.ge.s32.totalorder %s30, 1
      %s32 = scalar_select %p31, 0, %s30
      %s33 = sadd.s32 1, %s24
      %s34 = scalar_select %p31, %s33, %s24
      %p35 = scmp.ge.s32.totalorder %s34, 2
      %s36 = scalar_select %p35, 0, %s34
      %s37 = sadd.s32 %s24, %s25
      %p38 = scmp.lt.s32.totalorder %s37, 0
      %s39 = scalar_select %p38, %s37, 0
      %s40 = sadd.s32 %s36, %s32
      %p41 = scmp.lt.s32.totalorder %s40, 0
      %s42 = scalar_select %p41, %s40, 0
      %s43 = ssub.s32 %s39, %s42
      %p44 = scmp.eq.s32.totalorder %s43, 0
      %s46 = sadd.s32 %s45, 1
      %s47 = scalar_select %p44, %s45, %s46
      %p50 = pneg %p44
      %p51 = scmp.eq.s32.totalorder %s17, 1
      %p52 = por %p50, %p51
      %p53 = scmp.ne.s32.totalorder %s45, %s48
      %p54 = scmp.eq.s32.totalorder %s17, 0
      %p55 = por %p53, %p54
      %p56 = scmp.ne.s32.totalorder %s45, %s48
      %p57 = scmp.eq.s32.totalorder %s22, 1
      %p58 = por %p56, %p57
      %p59 = scmp.ne.s32.totalorder %s48, %s49
      %p60 = scmp.eq.s32.totalorder %s22, 0
      %p61 = por %p59, %p60
      %p62 = scmp.ne.s32.totalorder %s48, %s49
      %p63 = scmp.eq.s32.totalorder %s23, 1
      %p64 = por %p62, %p63
      %p66 = scmp.ne.s32.totalorder %s49, %s65
      %p67 = scmp.eq.s32.totalorder %s23, 0
      %p68 = por %p66, %p67
      %s69 = sadd.s32 %s24, %s25
      %p70 = scmp.lt.s32.totalorder %s69, 0
      %s71 = scalar_select %p70, %s69, 0
      %s72 = sadd.s32 %s36, %s32
      %p73 = scmp.lt.s32.totalorder %s72, 0
      %s74 = scalar_select %p73, %s72, 0
      %s75 = ssub.s32 %s71, %s74
      %p76 = scmp.eq.s32.totalorder %s75, 0
      %s78 = sadd.s32 %s77, 1
      %s79 = scalar_select %p76, %s77, %s78
      %p82 = pneg %p76
      %p83 = scmp.eq.s32.totalorder %s17, 1
      %p84 = por %p82, %p83
      %p85 = scmp.ne.s32.totalorder %s77, %s80
      %p86 = scmp.eq.s32.totalorder %s17, 0
      %p87 = por %p85, %p86
      %p88 = scmp.ne.s32.totalorder %s77, %s80
      %p89 = scmp.eq.s32.totalorder %s22, 1
      %p90 = por %p88, %p89
      %p91 = scmp.ne.s32.totalorder %s80, %s81
      %p92 = scmp.eq.s32.totalorder %s22, 0
      %p93 = por %p91, %p92
      %p94 = scmp.ne.s32.totalorder %s80, %s81
      %p95 = scmp.eq.s32.totalorder %s23, 1
      %p96 = por %p94, %p95
      %p98 = scmp.ne.s32.totalorder %s81, %s97
      %p99 = scmp.eq.s32.totalorder %s23, 0
      %p100 = por %p98, %p99
      %s101 = ssub.s32 %s24, %s36
      %p102 = scmp.eq.s32.totalorder %s101, 0
      %s104 = sadd.s32 %s103, 1
      %s105 = scalar_select %p102, %s103, %s104
      %p108 = pneg %p102
      %p109 = scmp.eq.s32.totalorder %s17, 1
      %p110 = por %p108, %p109
      %p111 = scmp.ne.s32.totalorder %s103, %s106
      %p112 = scmp.eq.s32.totalorder %s17, 0
      %p113 = por %p111, %p112
      %p114 = scmp.ne.s32.totalorder %s103, %s106
      %p115 = scmp.eq.s32.totalorder %s22, 1
      %p116 = por %p114, %p115
      %p117 = scmp.ne.s32.totalorder %s106, %s107
      %p118 = scmp.eq.s32.totalorder %s22, 0
      %p119 = por %p117, %p118
      %p120 = scmp.ne.s32.totalorder %s106, %s107
      %p121 = scmp.eq.s32.totalorder %s23, 1
      %p122 = por %p120, %p121
      %p124 = scmp.ne.s32.totalorder %s107, %s123
      %p125 = scmp.eq.s32.totalorder %s23, 0
      %p126 = por %p124, %p125
      %p127 = scmp.le.s32.totalorder 1, %s17
      %p128 = scmp.lt.s32.totalorder %s17, 3
      %p129 = pnand %p127, %p128
      %p130 = pneg %p129
      // Predicated region
      $region9: #{tpu_custom_call.1} parent=5 // pred_check
        _
      $region10: #{tpu_custom_call.1} parent=5 // pred_check_branch
        %132 = sbr.rel (%p129) target = $region12
      $region11: #{tpu_custom_call.1} parent=5 // pred_region
        %s133 = ssub.s32 %s17, 1
      $region12: #{tpu_custom_call.1} parent=5 // pred_fallthru
        _
      %p134 = scmp.lt.s32.totalorder %s17, 2
      // Predicated region
      $region13: #{tpu_custom_call.1} parent=5 // pred_check
        %p135 = pneg %p134
      $region14: #{tpu_custom_call.1} parent=5 // pred_check_branch
        %137 = sbr.rel (%p135) target = $region16
      $region15: #{tpu_custom_call.1} parent=5 // pred_region
        // Predicated region
        $region17: #{tpu_custom_call.1} parent=15 // pred_check
          %p138 = pneg %p55
        $region18: #{tpu_custom_call.1} parent=15 // pred_check_branch
          %140 = sbr.rel (%p138) target = $region20
        $region19: #{tpu_custom_call.1} parent=15 // pred_region
          %s141 = sand.u32 %s45, 1
          %s142 = scalar_lea.sflag [#allocation3], %s141
          %s143 = sand.u32 %s45, 1
          %s144 = smul.addr %s143, 16
          %s145 = scalar_lea.vmem [#allocation2], %s144
          %s146 = sadd.s32 %s24, %s25
          %p147 = scmp.lt.s32.totalorder %s146, 0
          %s148 = scalar_select %p147, %s146, 0
          %s149 = smul.u32 2, %s148
          %151 = vsyncadd %s142, 0
          %s152 = smul.addr %s149, 8
          %s153 = scalar_lea.hbm %s0, %s152
          %s154 = sshll.u32 %s153, 4
          %s155 = int_to_ptr.hbm [resolvable:$true] %s154
          %s156 = sshll.u32 %s145, 4
          %s157 = int_to_ptr.vmem [resolvable:$true] %s156
          %162 = dma.hbm_to_vmem [thread:$0]  %s155, 256, %s157, %s142, 128, 128, 8
        $region20: #{tpu_custom_call.1} parent=15 // pred_fallthru
          _
        // Predicated region
        $region21: #{tpu_custom_call.1} parent=15 // pred_check
          %p163 = pneg %p87
        $region22: #{tpu_custom_call.1} parent=15 // pred_check_branch
          %165 = sbr.rel (%p163) target = $region24
        $region23: #{tpu_custom_call.1} parent=15 // pred_region
          %s166 = sand.u32 %s77, 1
          %s167 = scalar_lea.sflag [#allocation6], %s166
          %s168 = sand.u32 %s77, 1
          %s169 = smul.addr %s168, 16
          %s170 = scalar_lea.vmem [#allocation5], %s169
          %s171 = sadd.s32 %s24, %s25
          %p172 = scmp.lt.s32.totalorder %s171, 0
          %s173 = scalar_select %p172, %s171, 0
          %s174 = smul.u32 2, %s173
          %176 = vsyncadd %s167, 0
          %s177 = smul.addr %s174, 8
          %s178 = scalar_lea.hbm %s1, %s177
          %s179 = sshll.u32 %s178, 4
          %s180 = int_to_ptr.hbm [resolvable:$true] %s179
          %s181 = sshll.u32 %s170, 4
          %s182 = int_to_ptr.vmem [resolvable:$true] %s181
          %187 = dma.hbm_to_vmem [thread:$0]  %s180, 256, %s182, %s167, 128, 128, 8
        $region24: #{tpu_custom_call.1} parent=15 // pred_fallthru
          _
      $region16: #{tpu_custom_call.1} parent=5 // pred_fallthru
        _
      %p188 = scmp.le.s32.totalorder 1, %s17
      %p189 = scmp.lt.s32.totalorder %s17, 3
      %p190 = pnand %p188, %p189
      %p191 = pneg %p190
      // Predicated region
      $region25: #{tpu_custom_call.1} parent=5 // pred_check
        _
      $region26: #{tpu_custom_call.1} parent=5 // pred_check_branch
        %193 = sbr.rel (%p190) target = $region28
      $region27: #{tpu_custom_call.1} parent=5 // pred_region
        %s194 = ssub.s32 %s17, 1
        %s195 = sand.u32 %s48, 1
        %s196 = scalar_lea.sflag [#allocation3], %s195
        %s197 = sand.u32 %s48, 1
        %s198 = smul.addr %s197, 16
        %s199 = scalar_lea.vmem [#allocation2], %s198
        // Predicated region
        $region29: #{tpu_custom_call.1} parent=27 // pred_check
          %p200 = pneg %p61
        $region30: #{tpu_custom_call.1} parent=27 // pred_check_branch
          %202 = sbr.rel (%p200) target = $region32
        $region31: #{tpu_custom_call.1} parent=27 // pred_region
          %204 = dma.done %s196, 256
        $region32: #{tpu_custom_call.1} parent=27 // pred_fallthru
          _
        %s205 = sand.u32 %s80, 1
        %s206 = scalar_lea.sflag [#allocation6], %s205
        %s207 = sand.u32 %s80, 1
        %s208 = smul.addr %s207, 16
        %s209 = scalar_lea.vmem [#allocation5], %s208
        // Predicated region
        $region33: #{tpu_custom_call.1} parent=27 // pred_check
          %p210 = pneg %p93
        $region34: #{tpu_custom_call.1} parent=27 // pred_check_branch
          %212 = sbr.rel (%p210) target = $region36
        $region35: #{tpu_custom_call.1} parent=27 // pred_region
          %214 = dma.done %s206, 256
        $region36: #{tpu_custom_call.1} parent=27 // pred_fallthru
          _
        %s215 = sand.u32 %s48, 1
        %s216 = scalar_lea.sflag [#allocation3], %s215
        %s217 = sand.u32 %s48, 1
        %s218 = smul.addr %s217, 16
        %s219 = scalar_lea.vmem [#allocation2], %s218
        %p220 = pneg %p61
        %p221 = pneg %p58
        %s222 = sand.u32 %s80, 1
        %s223 = scalar_lea.sflag [#allocation6], %s222
        %s224 = sand.u32 %s80, 1
        %s225 = smul.addr %s224, 16
        %s226 = scalar_lea.vmem [#allocation5], %s225
        %p227 = pneg %p93
        %p228 = pneg %p90
        %p229 = pneg %p119
        %p230 = pneg %p116
        %s231 = sand.u32 %s106, 1
        %s232 = scalar_lea.sflag [#allocation4], %s231
        %s233 = sand.u32 %s106, 1
        %s234 = smul.addr %s233, 8
        %s235 = scalar_lea.vmem [#allocation7], %s234
        %s236 = sadd.s32 %s26, %s27
        %p237 = scmp.lt.s32.totalorder %s236, 0
        %s238 = scalar_select %p237, %s236, 0
        %s239 = smul.u32 2, %s238
        %s240 = sadd.s32 %s26, %s27
        %p241 = scmp.lt.s32.totalorder %s240, 0
        %s242 = scalar_select %p241, %s240, 0
        %s243 = smul.u32 2, %s242
        %s244 = sadd.s32 %s26, %s27
        %p245 = scmp.eq.s32.totalorder %s27, 0
        // Predicated region
        $region37: #{tpu_custom_call.1} parent=27 // pred_check
          %p246 = pneg %p245
        $region38: #{tpu_custom_call.1} parent=27 // pred_check_branch
          %248 = sbr.rel (%p246) target = $region40
        $region39: #{tpu_custom_call.1} parent=27 // pred_region
          %249 = vst [vmem:[%s235] sm:$0xff] 0.0
        $region40: #{tpu_custom_call.1} parent=27 // pred_fallthru
          _
        %v250 = vld [vmem:[%s199] sm:$0xff]
        %v251 = vld [vmem:[%s199 + $0x8] sm:$0xff]
        %v252 = vld [vmem:[%s209] sm:$0xff]
        %v253 = vld [vmem:[%s209 + $0x8] sm:$0xff]
        %v254 = vsub.f32 %v250, %v252
        %v255 = vsub.f32 %v251, %v253
        %v256 = vmul.f32 %v254, %v254
        %v257 = vmul.f32 %v255, %v255
        %v258 = vadd.f32 %v256, 1e-06
        %v259 = vadd.f32 %v257, 1e-06
        %v260 = vrsqrt.pop %v258
        %v261 = vmul.f32 %v260, %v258
        %v262 = vmul.f32 %v261, %v260
        %v263 = vmul.f32 0.5, %v262
        %v264 = vsub.f32 1.5, %v263
        %v265 = vmul.f32 %v260, %v264
        %v266 = vmul.f32 %v258, %v265
        %vm267 = vcmp.eq.f32.partialorder %v258, inf
        %v268 = vsel %vm267, %v258, %v266
        %vm269 = vcmp.eq.f32.partialorder %v258, 0.0
        %v270 = vand.u32 %v258, 2147483648
        %v271 = vsel %vm269, %v270, %v268
        %v272 = vrsqrt.pop %v259
        %v273 = vmul.f32 %v272, %v259
        %v274 = vmul.f32 %v273, %v272
        %v275 = vmul.f32 0.5, %v274
        %v276 = vsub.f32 1.5, %v275
        %v277 = vmul.f32 %v272, %v276
        %v278 = vmul.f32 %v259, %v277
        %vm279 = vcmp.eq.f32.partialorder %v259, inf
        %v280 = vsel %vm279, %v259, %v278
        %vm281 = vcmp.eq.f32.partialorder %v259, 0.0
        %v282 = vand.u32 %v259, 2147483648
        %v283 = vsel %vm281, %v282, %v280
        %p284 = scmp.lt.s32.totalorder %s244, 1
        // Predicated region
        $region41: #{tpu_custom_call.1} parent=27 // pred_check
          %p285 = pneg %p284
        $region42: #{tpu_custom_call.1} parent=27 // pred_check_branch
          %287 = sbr.rel (%p285) target = $region44
        $region43: #{tpu_custom_call.1} parent=27 // pred_region
          %v288 = vld [vmem:[%s235] sm:$0xff]
          %v289 = vadd.f32 %v271, %v283
          %v290 = vadd.f32 %v288, %v289
          %291 = vst [vmem:[%s235] sm:$0xff] %v290
        $region44: #{tpu_custom_call.1} parent=27 // pred_fallthru
          _
        %p292 = scmp.ge.s32.totalorder %s244, 1
        // Predicated region
        $region45: #{tpu_custom_call.1} parent=27 // pred_check
          %p293 = pneg %p292
        $region46: #{tpu_custom_call.1} parent=27 // pred_check_branch
          %295 = sbr.rel (%p293) target = $region48
        $region47: #{tpu_custom_call.1} parent=27 // pred_region
          %v296 = vlaneseq
          %v297 = vshrl.u32 %v296, 7
          %v298 = vadd.s32 %v297, 8
          %s299 = smul.u32 %s244, 16
          %v300 = vstv %s299
          %v301 = vadd.s32 %v297, %v300
          %v302 = vadd.s32 %v298, %v300
          %v303 = vlaneseq
          %v304 = vand.u32 %v303, 127
          %v305 = vmul.u32 %v301, 128
          %v306 = vmul.u32 %v302, 128
          %v307 = vadd.s32 %v305, %v304
          %v308 = vadd.s32 %v306, %v304
          %vm309 = vcmp.lt.s32.totalorder %v307, 2048
          %vm310 = vcmp.lt.s32.totalorder %v308, 2048
          %v311 = vld [vmem:[%s235] sm:$0xff]
          %v312 = vsel %vm309, %v271, 0.0
          %v313 = vsel %vm310, %v283, 0.0
          %v314 = vadd.f32 %v312, %v313
          %v315 = vadd.f32 %v311, %v314
          %316 = vst [vmem:[%s235] sm:$0xff] %v315
        $region48: #{tpu_custom_call.1} parent=27 // pred_fallthru
          _
        %s317 = sand.u32 %s106, 1
        %s318 = scalar_lea.sflag [#allocation4], %s317
        %s319 = sand.u32 %s106, 1
        %s320 = smul.addr %s319, 8
        %s321 = scalar_lea.vmem [#allocation7], %s320
        // Predicated region
        $region49: #{tpu_custom_call.1} parent=27 // pred_check
          %p322 = pneg %p116
        $region50: #{tpu_custom_call.1} parent=27 // pred_check_branch
          %324 = sbr.rel (%p322) target = $region52
        $region51: #{tpu_custom_call.1} parent=27 // pred_region
          %326 = vsyncadd %s318, 0
          %s327 = smul.addr %s26, 8
          %s328 = scalar_lea.hbm %s2, %s327
          %s330 = sshll.u32 %s321, 4
          %s331 = int_to_ptr.vmem [resolvable:$true] %s330
          %s332 = sshll.u32 %s328, 4
          %s333 = int_to_ptr.hbm [resolvable:$true] %s332
          %335 = dma.vmem_to_hbm [thread:$0]  %s331, 128, %s333, %s318
        $region52: #{tpu_custom_call.1} parent=27 // pred_fallthru
          _
      $region28: #{tpu_custom_call.1} parent=5 // pred_fallthru
        _
      %p336 = scmp.le.s32.totalorder 2, %s17
      // Predicated region
      $region53: #{tpu_custom_call.1} parent=5 // pred_check
        %p337 = pneg %p336
      $region54: #{tpu_custom_call.1} parent=5 // pred_check_branch
        %339 = sbr.rel (%p337) target = $region56
      $region55: #{tpu_custom_call.1} parent=5 // pred_region
        %s340 = ssub.s32 %s17, 2
        // Predicated region
        $region57: #{tpu_custom_call.1} parent=55 // pred_check
          %p341 = pneg %p122
        $region58: #{tpu_custom_call.1} parent=55 // pred_check_branch
          %343 = sbr.rel (%p341) target = $region60
        $region59: #{tpu_custom_call.1} parent=55 // pred_region
          %s344 = sand.u32 %s107, 1
          %s345 = scalar_lea.sflag [#allocation4], %s344
          %s346 = sand.u32 %s107, 1
          %s347 = smul.addr %s346, 8
          %s348 = scalar_lea.vmem [#allocation7], %s347
          %350 = dma.done %s345, 128
        $region60: #{tpu_custom_call.1} parent=55 // pred_fallthru
          _
      $region56: #{tpu_custom_call.1} parent=5 // pred_fallthru
        _
    $region6: #{tpu_custom_call.1} parent=1 // loop_footer
      %s21 = sadd.s32 1, %s17
    $region7: #{tpu_custom_call.1} parent=1 // loop_footer_branch
      %16 = sbr.rel target = $region3
    $region8: #{tpu_custom_call.1} parent=1 // loop_exit
      _
    %351 = vsyncpa [#allocation3], 1
    %s352 = scalar_lea.sflag [#allocation3], 1
    %353 = vsyncpa %s352, 1
    %354 = vsyncpa [#allocation6], 1
    %s355 = scalar_lea.sflag [#allocation6], 1
    %356 = vsyncpa %s355, 1
    %357 = vsyncpa [#allocation4], 1
    %s358 = scalar_lea.sflag [#allocation4], 1
    %359 = vsyncpa %s358, 1

</llo_original>
